<compile_context>
chip_gen: v5e
topology: v5e:2x2
jax: 0.10.0
libtpu: 0.0.40
codegen_flags: <defaults>
</compile_context>

<pallas_src>
import jax
import jax.numpy as jnp
from jax.experimental import pallas as pl
from jax.experimental.pallas import tpu as pltpu


def _round_up(a, b):
    return ((a + b - 1) // b) * b


def _vmem_cap_bytes():
    """Per-core VMEM capacity (v5e/v6e: 128 MiB, v7x: 64 MiB)."""
    try:
        return int(pltpu.get_tpu_info().vmem_capacity_bytes)
    except Exception:
        return 64 << 20  # conservative fallback (v7x per-core)


def _vmem_ceiling_bytes():
    cap = _vmem_cap_bytes()
    head = (8 << 20) if cap <= (64 << 20) else (16 << 20)
    return cap - head  # ~56 MiB on v7x, ~112 MiB on v5e/v6e


def _maybe_buffered_spec(block_shape, index_map, buffers=None):
    """BlockSpec with optional pipeline depth; falls back if unsupported."""
    if buffers is None:
        return pl.BlockSpec(block_shape, index_map)
    try:
        return pl.BlockSpec(block_shape, index_map,
                            pipeline_mode=pl.Buffered(buffers))
    except TypeError:  # older jax without pipeline_mode kwarg
        return pl.BlockSpec(block_shape, index_map)


def _pick_col_tile(out_dim, p, tm_cap, vmem_budget, tn_target=2048):
    """Lane-aligned O-column tile: as large as VMEM allows, preferring an
    exact divisor of round_up(out_dim, 128) so no output columns are padded."""
    o128 = _round_up(out_dim, 128)
    tn = max(128, (min(tn_target, o128) // 128) * 128)

    def need(t):
        return (2 * tm_cap * p * 2      # h tile (bf16), double-buffered
                + 3 * p * t * 2         # W2 tile (bf16), Buffered(3)
                + 2 * t * 4             # b2 tile (f32), double-buffered
                + 2 * tm_cap * t * 4)   # out tile (f32), double-buffered

    while tn > 128 and need(tn) > vmem_budget:
        tn -= 128
    # Prefer an exact divisor of o128 (no padded columns) within 2x of tn.
    for cand in range(tn, max(128, tn // 2) - 1, -128):
        if o128 % cand == 0:
            return cand
    return tn


# ------------------------------ kernels ------------------------------------ #

def _layer1_kernel(x_ref, w1_ref, b1_ref, h_ref):
    """h tile = tanh(x @ W1 + b1); bf16 MXU matmul, f32 accumulation."""
    acc = jnp.dot(x_ref[...], w1_ref[...], preferred_element_type=jnp.float32)
    h_ref[...] = jnp.tanh(acc + b1_ref[...]).astype(h_ref.dtype)


def _layer2_kernel(h_ref, w2_ref, b2_ref, o_ref):
    """out tile (i, j) = h[i] @ W2[:, j] + b2[j]."""
    acc = jnp.dot(h_ref[...], w2_ref[...], preferred_element_type=jnp.float32)
    o_ref[...] = (acc + b2_ref[...]).astype(o_ref.dtype)


# ------------------------------ wrapper ------------------------------------ #

def prefix_mlp(x, w1_bf, b1_2d, w2_bf, b2_2d, *, out_dim, tn, tm_cap=512):
    """x: (N, H) f32 -> (N, out_dim) f32.

    Weights are pre-processed once (see PrefixEncoderPallas.__init__):
      w1_bf : (H, P)      bf16
      b1_2d : (1, P)      f32
      w2_bf : (P, O_pad)  bf16  (columns zero-padded to a multiple of tn)
      b2_2d : (1, O_pad)  f32
    """
    N, H = x.shape
    P = w1_bf.shape[1]
    O_pad = w2_bf.shape[1]
    assert O_pad % tn == 0

    # Row tile: minimize padding (tm = ceil(N / n_tiles) rounded up to 8).
    n_row = -(-N // tm_cap)
    tm = _round_up(-(-N // n_row), 8)
    N_pad = tm * n_row
    n_col = O_pad // tn

    x_bf = x.astype(jnp.bfloat16)
    if N_pad != N:
        # Padded rows give h = tanh(b1) and garbage outputs; the final slice
        # below removes them, so this is harmless.
        x_bf = jnp.pad(x_bf, ((0, N_pad - N), (0, 0)))

    vmem_ceiling = _vmem_ceiling_bytes()

    # ---------------- layer 1: h = tanh(x @ W1 + b1) ---------------- #
    l1_need = (2 * tm * H * 2 + H * P * 2 + P * 4 + 2 * tm * P * 2) + (4 << 20)
    h = pl.pallas_call(
        _layer1_kernel,
        out_shape=jax.ShapeDtypeStruct((N_pad, P), jnp.bfloat16),
        grid_spec=pltpu.PrefetchScalarGridSpec(
            num_scalar_prefetch=0,
            grid=(n_row,),
            in_specs=[
                pl.BlockSpec((tm, H), lambda i: (i, 0)),
                # Constant index -> fetched once; single buffer saves VMEM.
                _maybe_buffered_spec((H, P), lambda i: (0, 0), buffers=1),
                _maybe_buffered_spec((1, P), lambda i: (0, 0), buffers=1),
            ],
            out_specs=pl.BlockSpec((tm, P), lambda i: (i, 0)),
        ),
        compiler_params=pltpu.CompilerParams(
            dimension_semantics=("parallel",),
            vmem_limit_bytes=int(min(vmem_ceiling, max(l1_need, 32 << 20))),
        ),
        cost_estimate=pl.CostEstimate(
            flops=2 * N_pad * H * P,
            transcendentals=N_pad * P,
            bytes_accessed=(x_bf.size * 2 + w1_bf.size * 2 + b1_2d.size * 4
                            + N_pad * P * 2),
        ),
    )(x_bf, w1_bf, b1_2d)

    # -------- layer 2: out = h @ W2 + b2 (HBM-bound W2 stream) -------- #
    l2_need = (2 * tm * P * 2 + 3 * P * tn * 2 + 2 * tn * 4
               + 2 * tm * tn * 4) + (4 << 20)
    out = pl.pallas_call(
        _layer2_kernel,
        out_shape=jax.ShapeDtypeStruct((N_pad, O_pad), jnp.float32),
        grid_spec=pltpu.PrefetchScalarGridSpec(
            num_scalar_prefetch=0,
            # O-column axis leads and is parallel: v7x's two TensorCores each
            # stream a disjoint half of W2.  W2's block index is constant
            # along the inner row axis, so it is read from HBM exactly once.
            grid=(n_col, n_row),
            in_specs=[
                pl.BlockSpec((tm, P), lambda j, i: (i, 0)),
                _maybe_buffered_spec((P, tn), lambda j, i: (0, j), buffers=3),
                pl.BlockSpec((1, tn), lambda j, i: (0, j)),
            ],
            out_specs=pl.BlockSpec((tm, tn), lambda j, i: (i, j)),
        ),
        compiler_params=pltpu.CompilerParams(
            dimension_semantics=("parallel", "parallel"),
            vmem_limit_bytes=int(min(vmem_ceiling, max(l2_need, 32 << 20))),
        ),
        cost_estimate=pl.CostEstimate(
            flops=2 * N_pad * P * O_pad,
            transcendentals=0,
            bytes_accessed=(N_pad * P * 2 * n_col + w2_bf.size * 2
                            + b2_2d.size * 4 + N_pad * O_pad * 4),
        ),
    )(h, w2_bf, b2_2d)

    if N_pad == N and O_pad == out_dim:
        return out  # exact-fit tiles: no copy
    return out[:N, :out_dim]


# --------------------------- PrefixEncoder module --------------------------- #

class PrefixEncoderPallas:
    """JAX/Pallas port of the PyTorch PrefixEncoder forward pass."""

    _TM_CAP = 512  # max row-tile; N = B*L is typically far smaller

    def __init__(self, *, pre_seq_len, hidden_size, prefix_hidden_size,
                 num_hidden_layers, prefix_projection=True,
                 residual_prefix_projection=False, key=None):
        self.prefix_projection = prefix_projection
        self.residual_prefix_projection = residual_prefix_projection
        self.hidden_size = hidden_size
        self.out_dim = num_hidden_layers * 2 * hidden_size
        key = jax.random.PRNGKey(0) if key is None else key
        k_emb, k_w1, k_b1, k_w2, k_b2 = jax.random.split(key, 5)

        if prefix_projection:
            # nn.Embedding(pre_seq_len, hidden_size)
            self.embedding = jax.random.normal(
                k_emb, (pre_seq_len, hidden_size), jnp.float32) * 0.02
            # nn.Linear(hidden_size, prefix_hidden_size)
            self.w1 = jax.random.normal(
                k_w1, (hidden_size, prefix_hidden_size), jnp.float32) * 0.02
            self.b1 = jax.random.normal(
                k_b1, (prefix_hidden_size,), jnp.float32) * 0.02
            # nn.Linear(prefix_hidden_size, num_hidden_layers*2*hidden_size)
            self.w2 = jax.random.normal(
                k_w2, (prefix_hidden_size, self.out_dim), jnp.float32) * 0.02
            self.b2 = jax.random.normal(
                k_b2, (self.out_dim,), jnp.float32) * 0.02
            if residual_prefix_projection and hidden_size != self.out_dim:
                # Matches PyTorch: (..., O) + (..., H) broadcast fails.
                raise ValueError("residual_prefix_projection requires "
                                 "hidden_size == 2*num_layers*hidden_size")

            # ---- one-time kernel preprocessing (NOT per forward) ----
            # W2 is the dominant tensor; cast/pad it exactly once here.
            vmem_budget = _vmem_ceiling_bytes()
            self._tn = _pick_col_tile(self.out_dim, prefix_hidden_size,
                                      self._TM_CAP, vmem_budget)
            o_pad = _round_up(self.out_dim, self._tn)
            self._w1_bf = self.w1.astype(jnp.bfloat16)
            self._b1_2d = self.b1.reshape(1, -1).astype(jnp.float32)
            w2_bf = self.w2.astype(jnp.bfloat16)
            b2_2d = self.b2.reshape(1, -1).astype(jnp.float32)
            if o_pad != self.out_dim:
                w2_bf = jnp.pad(w2_bf, ((0, 0), (0, o_pad - self.out_dim)))
                b2_2d = jnp.pad(b2_2d, ((0, 0), (0, o_pad - self.out_dim)))
            self._w2_bf = w2_bf
            self._b2_2d = b2_2d
        else:
            # nn.Embedding(pre_seq_len, num_hidden_layers*2*hidden_size)
            self.embedding = jax.random.normal(
                k_emb, (pre_seq_len, self.out_dim), jnp.float32) * 0.02

    def __call__(self, prefix):
        """prefix: (B, L) int32 -> (B, L, 2*layers*hidden) float32."""
        B, L = prefix.shape
        # Embedding gather kept as plain-JAX glue.
        # TODO(synk): fuse the gather into the layer-1 kernel via
        # scalar-prefetched row indices once it is worth the complexity.
        prefix_tokens = jnp.take(self.embedding, prefix, axis=0)  # (B, L, E)
        if not self.prefix_projection:
            return prefix_tokens
        x = prefix_tokens.reshape(B * L, self.hidden_size)
        y = prefix_mlp(x, self._w1_bf, self._b1_2d, self._w2_bf, self._b2_2d,
                       out_dim=self.out_dim, tn=self._tn, tm_cap=self._TM_CAP)
        if self.residual_prefix_projection:
            # Exact f32 residual (only reachable when H == out_dim).
            y = y + x
        return y.reshape(B, L, self.out_dim)


# ------------------------------ reference check ----------------------------- #

def _reference(enc, prefix):
    prefix_tokens = jnp.take(enc.embedding, prefix, axis=0)
    if not enc.prefix_projection:
        return prefix_tokens
    h = jnp.tanh(prefix_tokens @ enc.w1 + enc.b1)
    out = h @ enc.w2 + enc.b2
    if enc.residual_prefix_projection:
        out = out + prefix_tokens
    return out


if __name__ == "__main__":
    # Small config: batch=2, prefix_len=8, hidden=32, prefix_hidden=64, layers=2
    B, L = 2, 8
    pre_seq_len = L
    hidden_size = 32
    prefix_hidden_size = 64
    num_hidden_layers = 2  # -> out_dim = 2*2*32 = 128

    enc = PrefixEncoderPallas(
        pre_seq_len=pre_seq_len,
        hidden_size=hidden_size,
        prefix_hidden_size=prefix_hidden_size,
        num_hidden_layers=num_hidden_layers,
        prefix_projection=True,
        residual_prefix_projection=False,
        key=jax.random.PRNGKey(0),
    )

    # prefix token ids: (B, L) in [0, pre_seq_len)
    key_idx = jax.random.PRNGKey(0)
    prefix = jax.random.randint(key_idx, (B, L), 0, pre_seq_len, dtype=jnp.int32)

    out = enc(prefix)
    out = jax.block_until_ready(out)

    ref = _reference(enc, prefix)
    assert out.shape == (B, L, num_hidden_layers * 2 * hidden_size), out.shape
    # bf16 matmul inputs + bf16 h intermediate (f32 accumulation) -> loosened
    # tolerance vs the f32 reference.
    assert jnp.allclose(out, ref, atol=2e-3, rtol=2e-2), \
        float(jnp.max(jnp.abs(out - ref)))

    print("KERNEL_OK")
</pallas_src>

<mosaic_0001>
module attributes {stable_mosaic.version = 11 : i64} {
  func.func @_layer1_kernel(%arg0: i32, %arg1: memref<16x32xbf16, #tpu.memory_space<vmem>>, %arg2: memref<32x64xbf16, #tpu.memory_space<vmem>>, %arg3: memref<1x64xf32, #tpu.memory_space<vmem>>, %arg4: memref<16x64xbf16, #tpu.memory_space<vmem>>) attributes {dimension_semantics = [#tpu.dimension_semantics<parallel>], iteration_bounds = array<i64: 1>, scalar_prefetch = 0 : i64, scratch_operands = 0 : i64, tpu.core_type = #tpu.core_type<tc>, window_params = [{transform_indices = @transform_0, window_bounds = array<i64: 16, 32>}, {pipeline_mode = #tpu.pipeline_mode<synchronous>, transform_indices = @transform_1, window_bounds = array<i64: 32, 64>}, {pipeline_mode = #tpu.pipeline_mode<synchronous>, transform_indices = @transform_2, window_bounds = array<i64: 1, 64>}, {transform_indices = @transform_3, window_bounds = array<i64: 16, 64>}]} {
    %c0 = arith.constant 0 : index
    %c0_0 = arith.constant 0 : index
    %0 = vector.load %arg1[%c0, %c0_0] : memref<16x32xbf16, #tpu.memory_space<vmem>>, vector<16x32xbf16>
    %c0_1 = arith.constant 0 : index
    %c0_2 = arith.constant 0 : index
    %1 = vector.load %arg2[%c0_1, %c0_2] : memref<32x64xbf16, #tpu.memory_space<vmem>>, vector<32x64xbf16>
    %cst = arith.constant dense<0.000000e+00> : vector<16x64xf32>
    %2 = tpu.matmul %0, %1, %cst {dimension_numbers = #tpu.dot_dimension_numbers<[1], [0], [0], [1], [0, 0, 1, 1], [], []>} : vector<16x32xbf16>, vector<32x64xbf16>, vector<16x64xf32> -> vector<16x64xf32>
    %c0_3 = arith.constant 0 : index
    %c0_4 = arith.constant 0 : index
    %3 = vector.load %arg3[%c0_3, %c0_4] : memref<1x64xf32, #tpu.memory_space<vmem>>, vector<1x64xf32>
    %4 = vector.broadcast %3 : vector<1x64xf32> to vector<16x64xf32>
    %5 = arith.addf %2, %4 : vector<16x64xf32>
    %6 = math.tanh %5 : vector<16x64xf32>
    %7 = arith.truncf %6 : vector<16x64xf32> to vector<16x64xbf16>
    %c0_5 = arith.constant 0 : index
    %c0_6 = arith.constant 0 : index
    %8 = vector.load %arg4[%c0_5, %c0_6] : memref<16x64xbf16, #tpu.memory_space<vmem>>, vector<16x64xbf16>
    tpu.vector_store %arg4[%c0_5, %c0_6], %7 {strides = array<i32>} : memref<16x64xbf16, #tpu.memory_space<vmem>>, vector<16x64xbf16>,
    return
  }
  func.func @transform_0(%arg0: i32) -> (i32, i32) {
    %c0_i32 = arith.constant 0 : i32
    %c0_i32_0 = arith.constant 0 : i32
    return %arg0, %c0_i32 : i32, i32
  }
  func.func @transform_1(%arg0: i32) -> (i32, i32) {
    %c0_i32 = arith.constant 0 : i32
    %c0_i32_0 = arith.constant 0 : i32
    %c0_i32_1 = arith.constant 0 : i32
    return %c0_i32, %c0_i32_0 : i32, i32
  }
  func.func @transform_2(%arg0: i32) -> (i32, i32) {
    %c0_i32 = arith.constant 0 : i32
    %c0_i32_0 = arith.constant 0 : i32
    %c0_i32_1 = arith.constant 0 : i32
    return %c0_i32, %c0_i32_0 : i32, i32
  }
  func.func @transform_3(%arg0: i32) -> (i32, i32) {
    %c0_i32 = arith.constant 0 : i32
    %c0_i32_0 = arith.constant 0 : i32
    return %arg0, %c0_i32 : i32, i32
  }
}

</mosaic_0001>

<llo_original>
// kernel: tpu_custom_call.1
$region0: #{tpu_custom_call.1}
  #allocation0 [shape = 'u32[]', space=smem, size = 0x4, offset = 0x4, fixed_abs, tag = 'smem constant byte address 0x4 - core index']
  #allocation1 [shape = 'u32[72,128]{1,0:T(1,128)}', space=vmem, size = 0x9000, scoped, tag = 'internal scratch']
  %s0 = inlined_call_operand.hbm [shape: bf16[16,32], index: 0, kind: input, shape index: {}]
  %s1 = inlined_call_operand.hbm [shape: bf16[32,64], index: 1, kind: input, shape index: {}]
  %s2 = inlined_call_operand.vmem [shape: f32[1,64], index: 2, kind: input, shape index: {}]
  %s3 = inlined_call_operand.hbm [shape: bf16[16,64], index: 3, kind: output, shape index: {}]
  %s4 = sld [smem:[#allocation0]]
  $region30: #{tpu_custom_call.1} parent=0
    _
  %s6 = ssub.s32 1, %s4
  %s7 = scalar_select 0, %s6, %s4
  $region1: #{tpu_custom_call.1} parent=0
    #allocation2 [shape = 'u8[4096]{0}', space=vmem, size = 0x1000, scoped, tag = 'input window, operand 0, single buffered']
    #allocation3 [shape = 's32[1]{0}', space=sflag, size = 0x4, scoped, tag = 'scoped memory for tpu_custom_call.1']
    #allocation4 [shape = 's32[1]{0}', space=sflag, size = 0x4, scoped, tag = 'scoped memory for tpu_custom_call.1']
    #allocation5 [shape = 'u8[8192]{0}', space=vmem, size = 0x2000, scoped, tag = 'input window, operand 1, single buffered']
    #allocation6 [shape = 's32[1]{0}', space=sflag, size = 0x4, scoped, tag = 'scoped memory for tpu_custom_call.1']
    #allocation7 [shape = 'u8[4096]{0}', space=vmem, size = 0x1000, scoped, tag = 'output window, operand 0, single buffered']
    %8 = vsyncpa [#allocation3], 0
    %9 = vsyncpa [#allocation6], 0
    %10 = vsyncpa [#allocation4], 0
    // Predicated region
    $region2: #{tpu_custom_call.1} parent=1 // pred_check
      _
    $region3: #{tpu_custom_call.1} parent=1 // pred_check_branch
      %12 = sbr.rel (0) target = $region5
    $region4: #{tpu_custom_call.1} parent=1 // pred_region
      %14 = vsyncadd [#allocation3], 0
      %s15 = sshll.u32 %s0, 4
      %s16 = int_to_ptr.hbm [resolvable:$true] %s15
      %s17 = sshll.u32 [#allocation2], 4
      %s18 = int_to_ptr.vmem [resolvable:$true] %s17
      %23 = dma.hbm_to_vmem [thread:$0]  %s16, 128, %s18, [#allocation3], 64, 64, 4
    $region5: #{tpu_custom_call.1} parent=1 // pred_fallthru
      _
    // Predicated region
    $region6: #{tpu_custom_call.1} parent=1 // pred_check
      _
    $region7: #{tpu_custom_call.1} parent=1 // pred_check_branch
      %25 = sbr.rel (0) target = $region9
    $region8: #{tpu_custom_call.1} parent=1 // pred_region
      %27 = vsyncadd [#allocation6], 0
      %s28 = sshll.u32 %s1, 4
      %s29 = int_to_ptr.hbm [resolvable:$true] %s28
      %s30 = sshll.u32 [#allocation5], 4
      %s31 = int_to_ptr.vmem [resolvable:$true] %s30
      %36 = dma.hbm_to_vmem [thread:$0]  %s29, 256, %s31, [#allocation6], 64, 64, 4
    $region9: #{tpu_custom_call.1} parent=1 // pred_fallthru
      _
    // Predicated region
    $region10: #{tpu_custom_call.1} parent=1 // pred_check
      _
    $region11: #{tpu_custom_call.1} parent=1 // pred_check_branch
      %38 = sbr.rel (0) target = $region13
    $region12: #{tpu_custom_call.1} parent=1 // pred_region
      _
    $region13: #{tpu_custom_call.1} parent=1 // pred_fallthru
      _
    // Predicated region
    $region14: #{tpu_custom_call.1} parent=1 // pred_check
      _
    $region15: #{tpu_custom_call.1} parent=1 // pred_check_branch
      %40 = sbr.rel (0) target = $region17
    $region16: #{tpu_custom_call.1} parent=1 // pred_region
      %42 = dma.done [#allocation3], 128
    $region17: #{tpu_custom_call.1} parent=1 // pred_fallthru
      _
    // Predicated region
    $region18: #{tpu_custom_call.1} parent=1 // pred_check
      _
    $region19: #{tpu_custom_call.1} parent=1 // pred_check_branch
      %44 = sbr.rel (0) target = $region21
    $region20: #{tpu_custom_call.1} parent=1 // pred_region
      %46 = dma.done [#allocation6], 256
    $region21: #{tpu_custom_call.1} parent=1 // pred_fallthru
      _
    %v48 = vld [vmem:[#allocation2] sm:$0xf]
    %v49 = vld [vmem:[#allocation2 + $0x4] sm:$0xf]
    %v50 = vld [vmem:[#allocation5] sm:$0xf]
    %v51 = vld [vmem:[#allocation5 + $0x4] sm:$0xf]
    %v52 = vld [vmem:[#allocation5 + $0x8] sm:$0xf]
    %v53 = vld [vmem:[#allocation5 + $0xc] sm:$0xf]
    %v54 = vld [vmem:[%s2] sm:$0x1]
    %v56 = vperm.slane %v54, 0
    %v60 = vunpack.c.l.b16 %v48
    %v61 = vunpack.c.l.b16 %v49
    %v62 = vpack.c.b16 %v61, %v60
    %v67 = vunpack.c.l.b16 %v50
    %v68 = vunpack.c.l.b16 %v51
    %v69 = vunpack.c.l.b16 %v52
    %v70 = vunpack.c.l.b16 %v53
    %v71 = vpack.c.b16 %v68, %v67
    %v72 = vpack.c.b16 %v70, %v69
    %vm75 = vcmask 261120
    %v77 = vsel %vm75, %v62, 0
    %79 = vmatpush.bf16.msra.mxu0 0
    %80 = vmatpush.bf16.msra.mxu0 0
    %81 = vmatpush.bf16.msra.mxu0 0
    %82 = vmatpush.bf16.msra.mxu0 0
    %83 = vmatpush.bf16.msra.mxu0 0
    %84 = vmatpush.bf16.msra.mxu0 0
    %85 = vmatpush.bf16.msra.mxu0 %v72
    %86 = vmatpush.bf16.msra.mxu0 %v71
    %87 = vmatmul.bf16.gmra.mxu0 %v77
    %v88 = vpop.f32.mrf.mxu0
    %v89 = vadd.f32 %v56, %v88
    %v90 = vpop.f32.mrf.mxu0
    %v91 = vadd.f32 %v56, %v90
    %92 = vdwg.mxu0
    %v93 = vtanh.pop %v89
    %v94 = vtanh.pop %v91
    %v95 = vpack.c.bf16 %v93, %v93
    %v96 = vpack.c.bf16 %v94, %v94
    %vm97 = vcmask 519168
    %98 = vst.msk [vmem:[#allocation7] sm:$0xf] %vm97, %v95
    %99 = vst.msk [vmem:[#allocation7 + $0x4] sm:$0xf] %vm97, %v96
    // Predicated region
    $region22: #{tpu_custom_call.1} parent=1 // pred_check
      _
    $region23: #{tpu_custom_call.1} parent=1 // pred_check_branch
      %101 = sbr.rel (0) target = $region25
    $region24: #{tpu_custom_call.1} parent=1 // pred_region
      %103 = vsyncadd [#allocation4], 0
      %s104 = sshll.u32 [#allocation7], 4
      %s105 = int_to_ptr.vmem [resolvable:$true] %s104
      %s106 = sshll.u32 %s3, 4
      %s107 = int_to_ptr.hbm [resolvable:$true] %s106
      %112 = dma.vmem_to_hbm [thread:$0]  %s105, 128, %s107, [#allocation4], 64, 64, 4
    $region25: #{tpu_custom_call.1} parent=1 // pred_fallthru
      _
    // Predicated region
    $region26: #{tpu_custom_call.1} parent=1 // pred_check
      _
    $region27: #{tpu_custom_call.1} parent=1 // pred_check_branch
      %114 = sbr.rel (0) target = $region29
    $region28: #{tpu_custom_call.1} parent=1 // pred_region
      %116 = dma.done [#allocation4], 128
    $region29: #{tpu_custom_call.1} parent=1 // pred_fallthru
      _
    %117 = vsyncpa [#allocation3], 1
    %118 = vsyncpa [#allocation6], 1
    %119 = vsyncpa [#allocation4], 1

</llo_original>
